<compile_context>
chip_gen: v7x
topology: tpu7x:2x2x1
jax: 0.10.0
libtpu: 0.0.40
codegen_flags: <defaults>
</compile_context>

<pallas_src>
import math
from functools import partial

import jax
import jax.numpy as jnp
from jax import lax
from jax.experimental import pallas as pl
from jax.experimental.pallas import tpu as pltpu


def _gelu_erf(x):
    # matches the reference: x * 0.5 * (1 + erf(x / sqrt(2)))
    return x * 0.5 * (1.0 + lax.erf(x / math.sqrt(2.0)))


# ---------------------------------------------------------------------------
# Kernel 1: fused Q/K/V projection.  One (batch, query-tile) block per step.
# ---------------------------------------------------------------------------
def qkv_proj_kernel(x_ref, wq_ref, bq_ref, wk_ref, bk_ref, wv_ref, bv_ref,
                    q_ref, k_ref, v_ref):
    x = x_ref[0].astype(jnp.bfloat16)                      # (TQ, D) bf16 MXU operand
    q = jnp.dot(x, wq_ref[...], preferred_element_type=jnp.float32) + bq_ref[0]
    k = jnp.dot(x, wk_ref[...], preferred_element_type=jnp.float32) + bk_ref[0]
    v = jnp.dot(x, wv_ref[...], preferred_element_type=jnp.float32) + bv_ref[0]
    q_ref[0] = q.astype(jnp.bfloat16)
    k_ref[0] = k.astype(jnp.bfloat16)
    v_ref[0] = v.astype(jnp.bfloat16)


# ---------------------------------------------------------------------------
# Kernel 2: attention (full KV per batch element, query-tiled) + output proj
#           + residual + LayerNorm + FFN.
# ---------------------------------------------------------------------------
def attn_ffn_kernel(x_ref, q_ref, k_ref, v_ref, bias_ref,
                    wo_ref, bo_ref, ln_g_ref, ln_b_ref,
                    w1_ref, b1_ref, w2_ref, b2_ref,
                    o_ref, *, n_heads, d_k):
    x = x_ref[0]                                   # (TQ, D) f32 residual path
    q = q_ref[0]                                   # (TQ, D) bf16
    k = k_ref[0]                                   # (S,  D) bf16
    v = v_ref[0]                                   # (S,  D) bf16
    bias = bias_ref[0].astype(jnp.float32)         # (TQ, S) additive mask bias (-1e9 / 0)

    scale = 1.0 / math.sqrt(d_k)
    acc = jnp.zeros_like(x)                        # (TQ, D) f32 attention-output accumulator

    for h in range(n_heads):                       # static unroll over heads
        sl = slice(h * d_k, (h + 1) * d_k)
        qh = q[:, sl]                              # (TQ, d_k) bf16
        kh = k[:, sl]                              # (S,  d_k) bf16
        vh = v[:, sl]                              # (S,  d_k) bf16
        # contract on d_k directly — no explicit transpose of kh
        s = lax.dot_general(qh, kh, (((1,), (1,)), ((), ())),
                            preferred_element_type=jnp.float32)        # (TQ, S) f32
        s = s * scale + bias
        m = jnp.max(s, axis=-1, keepdims=True)
        e = jnp.exp(s - m)
        p = e * pl.reciprocal(jnp.sum(e, axis=-1, keepdims=True), approx=True)
        ctx_h = jnp.dot(p.astype(jnp.bfloat16), vh,
                        preferred_element_type=jnp.float32)            # (TQ, d_k) f32
        # fused output projection: wo_ref is (H, d_k, D)
        acc = acc + jnp.dot(ctx_h.astype(jnp.bfloat16), wo_ref[h],
                            preferred_element_type=jnp.float32)        # (TQ, D) f32

    attn_out = acc + bo_ref[0]

    # residual + LayerNorm (f32, eps=1e-5, biased variance — as nn.LayerNorm)
    resid = attn_out + x
    mu = jnp.mean(resid, axis=-1, keepdims=True)
    var = jnp.mean(jnp.square(resid - mu), axis=-1, keepdims=True)
    ln = (resid - mu) * lax.rsqrt(var + 1e-5)
    ln = ln * ln_g_ref[0] + ln_b_ref[0]

    # FFN: fc2(gelu(fc1(x))) — bf16 MXU operands, f32 accumulation
    h1 = jnp.dot(ln.astype(jnp.bfloat16), w1_ref[...],
                 preferred_element_type=jnp.float32) + b1_ref[0]       # (TQ, Dff)
    h1 = _gelu_erf(h1)
    out = jnp.dot(h1.astype(jnp.bfloat16), w2_ref[...],
                  preferred_element_type=jnp.float32) + b2_ref[0]      # (TQ, D)

    o_ref[0] = out.astype(o_ref.dtype)


# ---------------------------------------------------------------------------
# Wrapper
# ---------------------------------------------------------------------------
def _pick_q_tile(S, target=256):
    """Largest multiple of 8 that divides S and is <= target (else full S)."""
    if S <= target:
        return S
    start = target - (target % 8)
    for t in range(start, 7, -8):
        if S % t == 0:
            return t
    return S


def _vmem_limit_bytes(S, D, d_ff, TQ, n_heads, d_k):
    """Budget scoped VMEM from the actual block footprints, with headroom."""
    bf, f4 = 2, 4
    weights = (n_heads * d_k * D + 2 * D * d_ff) * bf + (2 * d_ff + 6 * D) * f4
    blocks = (TQ * D * f4        # x tile (f32)
              + TQ * D * bf      # q tile
              + 2 * S * D * bf   # k, v (full sequence)
              + TQ * S * bf      # mask-bias tile
              + TQ * D * f4)     # output tile
    scratch = (TQ * S + TQ * d_ff + 6 * TQ * D) * f4   # scores / h1 / LN temporaries
    est = int((2 * (weights + blocks) + scratch) * 1.5)  # 2x double-buffer + headroom

    ceiling = 96 * 1024 * 1024                # safe on v5e/v6e (128 MiB physical)
    try:                                      # tighten to the real chip (v7x: 64 MiB)
        cap = pltpu.get_tpu_info().vmem_capacity_bytes
        ceiling = min(ceiling, int(cap * 3 // 4))
    except Exception:
        pass
    return int(max(32 * 1024 * 1024, min(est, ceiling)))


def encoder_layer(x, mask, params, *, n_heads, d_k):
    """x: (B, S, D) float32, mask: (B, S, S) float (1.0 == masked position)."""
    B, S, D = x.shape
    d_ff = params["w1"].shape[1]
    assert n_heads * d_k == D

    TQ = _pick_q_tile(S)
    n_q = S // TQ
    bf16 = jnp.bfloat16

    # bf16 weights: full MXU rate, half the VMEM / HBM footprint.
    wq = params["wq"].astype(bf16)
    wk = params["wk"].astype(bf16)
    wv = params["wv"].astype(bf16)
    wo = params["wo"].astype(bf16).reshape(n_heads, d_k, D)   # head-major for fused out-proj
    w1 = params["w1"].astype(bf16)
    w2 = params["w2"].astype(bf16)
    bq, bk, bv, bo = params["bq"], params["bk"], params["bv"], params["bo"]
    ln_g, ln_b = params["ln_g"], params["ln_b"]
    b1, b2 = params["b1"], params["b2"]

    # Additive attention-mask bias (bf16): hoisted out of the head loop and
    # halves the (B,S,S) HBM read.
    mask_bias = (mask.astype(jnp.float32) * jnp.float32(-1e9)).astype(bf16)

    cparams = pltpu.CompilerParams(
        dimension_semantics=("parallel", "parallel"),
        vmem_limit_bytes=_vmem_limit_bytes(S, D, d_ff, TQ, n_heads, d_k),
    )

    def const(shape):   # whole-array blocks with a constant index_map (weights/biases)
        return pl.BlockSpec(shape, lambda b, i, _n=len(shape): (0,) * _n)

    tile_spec = pl.BlockSpec((1, TQ, D), lambda b, i: (b, i, 0))
    full_seq_spec = pl.BlockSpec((1, S, D), lambda b, i: (b, 0, 0))
    mask_spec = pl.BlockSpec((1, TQ, S), lambda b, i: (b, i, 0))

    # ---- pass 1: Q/K/V projection (bf16 outputs) ---------------------------
    q, k, v = pl.pallas_call(
        qkv_proj_kernel,
        out_shape=tuple(jax.ShapeDtypeStruct((B, S, D), bf16) for _ in range(3)),
        grid_spec=pltpu.PrefetchScalarGridSpec(
            num_scalar_prefetch=0,
            grid=(B, n_q),
            in_specs=[
                tile_spec,
                const((D, D)), const((1, D)),
                const((D, D)), const((1, D)),
                const((D, D)), const((1, D)),
            ],
            out_specs=(tile_spec, tile_spec, tile_spec),
        ),
        compiler_params=cparams,
    )(x, wq, bq, wk, bk, wv, bv)

    # ---- pass 2: attention + out-proj + residual/LN + FFN ------------------
    out = pl.pallas_call(
        partial(attn_ffn_kernel, n_heads=n_heads, d_k=d_k),
        out_shape=jax.ShapeDtypeStruct((B, S, D), x.dtype),
        grid_spec=pltpu.PrefetchScalarGridSpec(
            num_scalar_prefetch=0,
            grid=(B, n_q),
            in_specs=[
                tile_spec,                          # x (f32, residual)
                tile_spec,                          # q tile (bf16)
                full_seq_spec,                      # k (bf16, full S)
                full_seq_spec,                      # v (bf16, full S)
                mask_spec,                          # mask bias (bf16)
                const((n_heads, d_k, D)), const((1, D)),   # wo, bo
                const((1, D)), const((1, D)),              # ln gamma, beta
                const((D, d_ff)), const((1, d_ff)),        # w1, b1
                const((d_ff, D)), const((1, D)),           # w2, b2
            ],
            out_specs=tile_spec,
        ),
        compiler_params=cparams,
    )(x, q, k, v, mask_bias, wo, bo, ln_g, ln_b, w1, b1, w2, b2)

    return out


# ---------------------------------------------------------------------------
# Pure-JAX reference (f32) for a sanity check.
# ---------------------------------------------------------------------------
def _reference(x, mask, params, *, n_heads, d_k):
    B, S, D = x.shape
    q = x @ params["wq"] + params["bq"][0]
    k = x @ params["wk"] + params["bk"][0]
    v = x @ params["wv"] + params["bv"][0]

    def split(t):  # (B, S, H*Dk) -> (B, H, S, Dk)
        return t.reshape(B, S, n_heads, d_k).transpose(0, 2, 1, 3)

    qh, kh, vh = split(q), split(k), split(v)
    scores = jnp.einsum("bhqd,bhkd->bhqk", qh, kh) / math.sqrt(d_k)
    scores = jnp.where(mask[:, None] > 0.5, -1e9, scores)
    attn = jax.nn.softmax(scores, axis=-1)
    ctx = jnp.einsum("bhqk,bhkd->bhqd", attn, vh).transpose(0, 2, 1, 3).reshape(B, S, D)
    attn_out = ctx @ params["wo"] + params["bo"][0]
    resid = attn_out + x
    mu = resid.mean(-1, keepdims=True)
    var = ((resid - mu) ** 2).mean(-1, keepdims=True)
    ln = (resid - mu) / jnp.sqrt(var + 1e-5) * params["ln_g"][0] + params["ln_b"][0]
    h1 = ln @ params["w1"] + params["b1"][0]
    h1 = h1 * 0.5 * (1.0 + lax.erf(h1 / math.sqrt(2.0)))
    return h1 @ params["w2"] + params["b2"][0]


if __name__ == "__main__":
    # small shapes consistent with the module (d_model -> 32, d_ff -> 64)
    B, S, D = 2, 8, 32
    N_HEADS, D_K = 4, 8
    D_FF = 64

    key = jax.random.PRNGKey(0)
    ks = jax.random.split(key, 16)

    def init(k, shape, scale=0.02):
        return (scale * jax.random.normal(k, shape)).astype(jnp.float32)

    params = {
        "wq": init(ks[0], (D, D)), "bq": init(ks[1], (1, D)),
        "wk": init(ks[2], (D, D)), "bk": init(ks[3], (1, D)),
        "wv": init(ks[4], (D, D)), "bv": init(ks[5], (1, D)),
        "wo": init(ks[6], (D, D)), "bo": init(ks[7], (1, D)),
        "ln_g": (1.0 + 0.1 * jax.random.normal(ks[8], (1, D))).astype(jnp.float32),
        "ln_b": init(ks[9], (1, D)),
        "w1": init(ks[10], (D, D_FF)), "b1": init(ks[11], (1, D_FF)),
        "w2": init(ks[12], (D_FF, D)), "b2": init(ks[13], (1, D)),
    }

    x = jax.random.normal(ks[14], (B, S, D), jnp.float32)
    # mask last two key positions of every sequence (1.0 == masked, like a pad mask)
    mask = jnp.zeros((B, S, S), jnp.float32).at[:, :, S - 2:].set(1.0)

    out = encoder_layer(x, mask, params, n_heads=N_HEADS, d_k=D_K)
    out = jax.block_until_ready(out)

    ref = _reference(x, mask, params, n_heads=N_HEADS, d_k=D_K)
    assert out.shape == (B, S, D)
    max_err = float(jnp.max(jnp.abs(out - ref)))
    # bf16 matmul operands (f32 accumulation) -> loosened tolerance vs the f32 reference
    assert max_err < 1e-2, f"mismatch vs JAX reference: max abs err {max_err}"

    print("KERNEL_OK")
</pallas_src>

<mosaic_0001>
module attributes {stable_mosaic.version = 11 : i64} {
  func.func @qkv_proj_kernel(%arg0: i32, %arg1: i32, %arg2: memref<1x8x32xf32, #tpu.memory_space<vmem>>, %arg3: memref<32x32xbf16, #tpu.memory_space<vmem>>, %arg4: memref<1x32xf32, #tpu.memory_space<vmem>>, %arg5: memref<32x32xbf16, #tpu.memory_space<vmem>>, %arg6: memref<1x32xf32, #tpu.memory_space<vmem>>, %arg7: memref<32x32xbf16, #tpu.memory_space<vmem>>, %arg8: memref<1x32xf32, #tpu.memory_space<vmem>>, %arg9: memref<1x8x32xbf16, #tpu.memory_space<vmem>>, %arg10: memref<1x8x32xbf16, #tpu.memory_space<vmem>>, %arg11: memref<1x8x32xbf16, #tpu.memory_space<vmem>>) attributes {dimension_semantics = [#tpu.dimension_semantics<parallel>, #tpu.dimension_semantics<parallel>], iteration_bounds = array<i64: 2, 1>, scalar_prefetch = 0 : i64, scratch_operands = 0 : i64, tpu.core_type = #tpu.core_type<tc>, window_params = [{transform_indices = @transform_0, window_bounds = array<i64: 1, 8, 32>}, {pipeline_mode = #tpu.pipeline_mode<synchronous>, transform_indices = @transform_1, window_bounds = array<i64: 32, 32>}, {pipeline_mode = #tpu.pipeline_mode<synchronous>, transform_indices = @transform_2, window_bounds = array<i64: 1, 32>}, {pipeline_mode = #tpu.pipeline_mode<synchronous>, transform_indices = @transform_3, window_bounds = array<i64: 32, 32>}, {pipeline_mode = #tpu.pipeline_mode<synchronous>, transform_indices = @transform_4, window_bounds = array<i64: 1, 32>}, {pipeline_mode = #tpu.pipeline_mode<synchronous>, transform_indices = @transform_5, window_bounds = array<i64: 32, 32>}, {pipeline_mode = #tpu.pipeline_mode<synchronous>, transform_indices = @transform_6, window_bounds = array<i64: 1, 32>}, {transform_indices = @transform_7, window_bounds = array<i64: 1, 8, 32>}, {transform_indices = @transform_8, window_bounds = array<i64: 1, 8, 32>}, {transform_indices = @transform_9, window_bounds = array<i64: 1, 8, 32>}]} {
    %c0 = arith.constant 0 : index
    %c0_0 = arith.constant 0 : index
    %c0_1 = arith.constant 0 : index
    %0 = vector.load %arg2[%c0, %c0_0, %c0_1] : memref<1x8x32xf32, #tpu.memory_space<vmem>>, vector<1x8x32xf32>
    %1 = vector.shape_cast %0 : vector<1x8x32xf32> to vector<8x32xf32>
    %2 = arith.truncf %1 : vector<8x32xf32> to vector<8x32xbf16>
    %c0_2 = arith.constant 0 : index
    %c0_3 = arith.constant 0 : index
    %3 = vector.load %arg3[%c0_2, %c0_3] : memref<32x32xbf16, #tpu.memory_space<vmem>>, vector<32x32xbf16>
    %cst = arith.constant dense<0.000000e+00> : vector<8x32xf32>
    %4 = tpu.matmul %2, %3, %cst {dimension_numbers = #tpu.dot_dimension_numbers<[1], [0], [0], [1], [0, 0, 1, 1], [], []>} : vector<8x32xbf16>, vector<32x32xbf16>, vector<8x32xf32> -> vector<8x32xf32>
    %c0_4 = arith.constant 0 : index
    %c0_5 = arith.constant 0 : index
    %5 = vector.load %arg4[%c0_4, %c0_5] : memref<1x32xf32, #tpu.memory_space<vmem>>, vector<1x32xf32>
    %6 = vector.shape_cast %5 : vector<1x32xf32> to vector<32xf32>
    %7 = vector.shape_cast %6 : vector<32xf32> to vector<1x32xf32>
    %8 = vector.broadcast %7 : vector<1x32xf32> to vector<8x32xf32>
    %9 = arith.addf %4, %8 : vector<8x32xf32>
    %c0_6 = arith.constant 0 : index
    %c0_7 = arith.constant 0 : index
    %10 = vector.load %arg5[%c0_6, %c0_7] : memref<32x32xbf16, #tpu.memory_space<vmem>>, vector<32x32xbf16>
    %cst_8 = arith.constant dense<0.000000e+00> : vector<8x32xf32>
    %11 = tpu.matmul %2, %10, %cst_8 {dimension_numbers = #tpu.dot_dimension_numbers<[1], [0], [0], [1], [0, 0, 1, 1], [], []>} : vector<8x32xbf16>, vector<32x32xbf16>, vector<8x32xf32> -> vector<8x32xf32>
    %c0_9 = arith.constant 0 : index
    %c0_10 = arith.constant 0 : index
    %12 = vector.load %arg6[%c0_9, %c0_10] : memref<1x32xf32, #tpu.memory_space<vmem>>, vector<1x32xf32>
    %13 = vector.shape_cast %12 : vector<1x32xf32> to vector<32xf32>
    %14 = vector.shape_cast %13 : vector<32xf32> to vector<1x32xf32>
    %15 = vector.broadcast %14 : vector<1x32xf32> to vector<8x32xf32>
    %16 = arith.addf %11, %15 : vector<8x32xf32>
    %c0_11 = arith.constant 0 : index
    %c0_12 = arith.constant 0 : index
    %17 = vector.load %arg7[%c0_11, %c0_12] : memref<32x32xbf16, #tpu.memory_space<vmem>>, vector<32x32xbf16>
    %cst_13 = arith.constant dense<0.000000e+00> : vector<8x32xf32>
    %18 = tpu.matmul %2, %17, %cst_13 {dimension_numbers = #tpu.dot_dimension_numbers<[1], [0], [0], [1], [0, 0, 1, 1], [], []>} : vector<8x32xbf16>, vector<32x32xbf16>, vector<8x32xf32> -> vector<8x32xf32>
    %c0_14 = arith.constant 0 : index
    %c0_15 = arith.constant 0 : index
    %19 = vector.load %arg8[%c0_14, %c0_15] : memref<1x32xf32, #tpu.memory_space<vmem>>, vector<1x32xf32>
    %20 = vector.shape_cast %19 : vector<1x32xf32> to vector<32xf32>
    %21 = vector.shape_cast %20 : vector<32xf32> to vector<1x32xf32>
    %22 = vector.broadcast %21 : vector<1x32xf32> to vector<8x32xf32>
    %23 = arith.addf %18, %22 : vector<8x32xf32>
    %24 = arith.truncf %9 : vector<8x32xf32> to vector<8x32xbf16>
    %c0_16 = arith.constant 0 : index
    %c0_17 = arith.constant 0 : index
    %c0_18 = arith.constant 0 : index
    %25 = vector.load %arg9[%c0_16, %c0_17, %c0_18] : memref<1x8x32xbf16, #tpu.memory_space<vmem>>, vector<1x8x32xbf16>
    %26 = vector.shape_cast %25 : vector<1x8x32xbf16> to vector<8x32xbf16>
    %27 = vector.shape_cast %24 : vector<8x32xbf16> to vector<1x8x32xbf16>
    tpu.vector_store %arg9[%c0_16, %c0_17, %c0_18], %27 {strides = array<i32>} : memref<1x8x32xbf16, #tpu.memory_space<vmem>>, vector<1x8x32xbf16>,
    %28 = arith.truncf %16 : vector<8x32xf32> to vector<8x32xbf16>
    %c0_19 = arith.constant 0 : index
    %c0_20 = arith.constant 0 : index
    %c0_21 = arith.constant 0 : index
    %29 = vector.load %arg10[%c0_19, %c0_20, %c0_21] : memref<1x8x32xbf16, #tpu.memory_space<vmem>>, vector<1x8x32xbf16>
    %30 = vector.shape_cast %29 : vector<1x8x32xbf16> to vector<8x32xbf16>
    %31 = vector.shape_cast %28 : vector<8x32xbf16> to vector<1x8x32xbf16>
    tpu.vector_store %arg10[%c0_19, %c0_20, %c0_21], %31 {strides = array<i32>} : memref<1x8x32xbf16, #tpu.memory_space<vmem>>, vector<1x8x32xbf16>,
    %32 = arith.truncf %23 : vector<8x32xf32> to vector<8x32xbf16>
    %c0_22 = arith.constant 0 : index
    %c0_23 = arith.constant 0 : index
    %c0_24 = arith.constant 0 : index
    %33 = vector.load %arg11[%c0_22, %c0_23, %c0_24] : memref<1x8x32xbf16, #tpu.memory_space<vmem>>, vector<1x8x32xbf16>
    %34 = vector.shape_cast %33 : vector<1x8x32xbf16> to vector<8x32xbf16>
    %35 = vector.shape_cast %32 : vector<8x32xbf16> to vector<1x8x32xbf16>
    tpu.vector_store %arg11[%c0_22, %c0_23, %c0_24], %35 {strides = array<i32>} : memref<1x8x32xbf16, #tpu.memory_space<vmem>>, vector<1x8x32xbf16>,
    return
  }
  func.func @transform_0(%arg0: i32, %arg1: i32) -> (i32, i32, i32) {
    %c0_i32 = arith.constant 0 : i32
    %c0_i32_0 = arith.constant 0 : i32
    return %arg0, %arg1, %c0_i32 : i32, i32, i32
  }
  func.func @transform_1(%arg0: i32, %arg1: i32) -> (i32, i32) {
    %c0_i32 = arith.constant 0 : i32
    %c0_i32_0 = arith.constant 0 : i32
    %c0_i32_1 = arith.constant 0 : i32
    return %c0_i32, %c0_i32_0 : i32, i32
  }
  func.func @transform_2(%arg0: i32, %arg1: i32) -> (i32, i32) {
    %c0_i32 = arith.constant 0 : i32
    %c0_i32_0 = arith.constant 0 : i32
    %c0_i32_1 = arith.constant 0 : i32
    return %c0_i32, %c0_i32_0 : i32, i32
  }
  func.func @transform_3(%arg0: i32, %arg1: i32) -> (i32, i32) {
    %c0_i32 = arith.constant 0 : i32
    %c0_i32_0 = arith.constant 0 : i32
    %c0_i32_1 = arith.constant 0 : i32
    return %c0_i32, %c0_i32_0 : i32, i32
  }
  func.func @transform_4(%arg0: i32, %arg1: i32) -> (i32, i32) {
    %c0_i32 = arith.constant 0 : i32
    %c0_i32_0 = arith.constant 0 : i32
    %c0_i32_1 = arith.constant 0 : i32
    return %c0_i32, %c0_i32_0 : i32, i32
  }
  func.func @transform_5(%arg0: i32, %arg1: i32) -> (i32, i32) {
    %c0_i32 = arith.constant 0 : i32
    %c0_i32_0 = arith.constant 0 : i32
    %c0_i32_1 = arith.constant 0 : i32
    return %c0_i32, %c0_i32_0 : i32, i32
  }
  func.func @transform_6(%arg0: i32, %arg1: i32) -> (i32, i32) {
    %c0_i32 = arith.constant 0 : i32
    %c0_i32_0 = arith.constant 0 : i32
    %c0_i32_1 = arith.constant 0 : i32
    return %c0_i32, %c0_i32_0 : i32, i32
  }
  func.func @transform_7(%arg0: i32, %arg1: i32) -> (i32, i32, i32) {
    %c0_i32 = arith.constant 0 : i32
    %c0_i32_0 = arith.constant 0 : i32
    return %arg0, %arg1, %c0_i32 : i32, i32, i32
  }
  func.func @transform_8(%arg0: i32, %arg1: i32) -> (i32, i32, i32) {
    %c0_i32 = arith.constant 0 : i32
    %c0_i32_0 = arith.constant 0 : i32
    return %arg0, %arg1, %c0_i32 : i32, i32, i32
  }
  func.func @transform_9(%arg0: i32, %arg1: i32) -> (i32, i32, i32) {
    %c0_i32 = arith.constant 0 : i32
    %c0_i32_0 = arith.constant 0 : i32
    return %arg0, %arg1, %c0_i32 : i32, i32, i32
  }
}

</mosaic_0001>

<llo_original>
// kernel: tpu_custom_call.1
$region0: #{tpu_custom_call.1}
  #allocation0 [shape = 'u32[]', space=smem, size = 0x4, offset = 0x4, fixed_abs, tag = 'smem constant byte address 0x4 - core index']
  #allocation1 [shape = 'u32[144,128]{1,0:T(1,128)}', space=vmem, size = 0x12000, scoped, tag = 'internal scratch']
  %s0 = inlined_call_operand.hbm [shape: f32[2,8,32], index: 0, kind: input, shape index: {}]
  %s1 = inlined_call_operand.hbm [shape: bf16[32,32], index: 1, kind: input, shape index: {}]
  %s2 = inlined_call_operand.vmem [shape: f32[1,32], index: 2, kind: input, shape index: {}]
  %s3 = inlined_call_operand.hbm [shape: bf16[32,32], index: 3, kind: input, shape index: {}]
  %s4 = inlined_call_operand.vmem [shape: f32[1,32], index: 4, kind: input, shape index: {}]
  %s5 = inlined_call_operand.vmem [shape: bf16[32,32], index: 5, kind: input, shape index: {}]
  %s6 = inlined_call_operand.vmem [shape: f32[1,32], index: 6, kind: input, shape index: {}]
  %s7 = inlined_call_operand.hbm [shape: bf16[2,8,32], index: 7, kind: output, shape index: {0}]
  %s8 = inlined_call_operand.hbm [shape: bf16[2,8,32], index: 8, kind: output, shape index: {1}]
  %s9 = inlined_call_operand.hbm [shape: bf16[2,8,32], index: 9, kind: output, shape index: {2}]
  %10 = xla_tuple %s7, %s8, %s9
  %s11 = sld [smem:[#allocation0]]
  $region89: #{tpu_custom_call.1} parent=0
    _
  %s13 = ssub.s32 1, %s11
  %s14 = scalar_select 0, %s13, %s11
  $region1: #{tpu_custom_call.1} parent=0
    #allocation2 [shape = 'u8[8192]{0}', space=vmem, size = 0x2000, scoped, tag = 'input window, operand 0']
    #allocation3 [shape = 's32[2]{0}', space=sflag, size = 0x8, scoped, tag = 'scoped memory for tpu_custom_call.1']
    #allocation4 [shape = 's32[2]{0}', space=sflag, size = 0x8, scoped, tag = 'scoped memory for tpu_custom_call.1']
    #allocation5 [shape = 'u8[8192]{0}', space=vmem, size = 0x2000, scoped, tag = 'input window, operand 1, single buffered']
    #allocation6 [shape = 's32[1]{0}', space=sflag, size = 0x4, scoped, tag = 'scoped memory for tpu_custom_call.1']
    #allocation7 [shape = 'u8[8192]{0}', space=vmem, size = 0x2000, scoped, tag = 'input window, operand 3, single buffered']
    #allocation8 [shape = 'u8[4096]{0}', space=vmem, size = 0x1000, scoped, tag = 'output window, operand 0']
    #allocation9 [shape = 'u8[4096]{0}', space=vmem, size = 0x1000, scoped, tag = 'output window, operand 1']
    #allocation10 [shape = 's32[2]{0}', space=sflag, size = 0x8, scoped, tag = 'scoped memory for tpu_custom_call.1']
    #allocation11 [shape = 'u8[4096]{0}', space=vmem, size = 0x1000, scoped, tag = 'output window, operand 2']
    %15 = vsyncpa [#allocation3], 0
    %s16 = scalar_lea.sflag [#allocation3], 1
    %17 = vsyncpa %s16, 0
    %18 = vsyncpa [#allocation6], 0
    %19 = vsyncpa [#allocation4], 0
    %s20 = scalar_lea.sflag [#allocation4], 1
    %21 = vsyncpa %s20, 0
    %22 = vsyncpa [#allocation10], 0
    %s23 = scalar_lea.sflag [#allocation10], 1
    %24 = vsyncpa %s23, 0
    loop: start=0, step=1, limit=4
    $region2: #{tpu_custom_call.1} parent=1 // loop_pre_header
      _
    $region3: #{tpu_custom_call.1} parent=1 // loop_header
      %s26 = sphi 0, %s30
      %p27 = scmp.ge.s32.totalorder %s26, 4
      %s33 = sphi 0, %s45
      %s34 = sphi 0, %s41
      %s35 = sphi 0, %s33
      %s36 = sphi 0, %s34
      %s37 = sphi 0, %s35
      %s38 = sphi 0, %s36
      %s50 = sphi 0, %s52
      %s53 = sphi 0, %s50
      %s54 = sphi 0, %s53
      %s70 = sphi 0, %s54
      %s74 = sphi 0, %s74
      %s76 = sphi 0, %s74
      %s77 = sphi 0, %s76
      %s91 = sphi 0, %s77
      %s95 = sphi 0, %s95
      %s97 = sphi 0, %s95
      %s98 = sphi 0, %s97
      %s112 = sphi 0, %s98
      %s116 = sphi 0, %s116
      %s118 = sphi 0, %s116
      %s119 = sphi 0, %s118
      %s133 = sphi 0, %s119
      %s137 = sphi 0, %s137
      %s139 = sphi 0, %s137
      %s140 = sphi 0, %s139
      %s154 = sphi 0, %s140
      %s158 = sphi 0, %s158
      %s160 = sphi 0, %s158
      %s161 = sphi 0, %s160
      %s175 = sphi 0, %s161
      %s179 = sphi 0, %s179
      %s181 = sphi 0, %s179
      %s182 = sphi 0, %s181
      %s196 = sphi 0, %s182
      %s204 = sphi 0, %s206
      %s207 = sphi 0, %s204
      %s208 = sphi 0, %s207
      %s224 = sphi 0, %s208
      %s232 = sphi 0, %s234
      %s235 = sphi 0, %s232
      %s236 = sphi 0, %s235
      %s252 = sphi 0, %s236
      %s260 = sphi 0, %s262
      %s263 = sphi 0, %s260
      %s264 = sphi 0, %s263
      %s280 = sphi 0, %s264
    $region4: #{tpu_custom_call.1} parent=1 // loop_header_branch
      %29 = sbr.rel (%p27) target = $region8
    $region5: #{tpu_custom_call.1} parent=1 // loop_body
      %s31 = ssub.s32 %s26, 1
      %s32 = ssub.s32 %s26, 2
      %s39 = sadd.s32 1, %s34
      %p40 = scmp.ge.s32.totalorder %s39, 1
      %s41 = scalar_select %p40, 0, %s39
      %s42 = sadd.s32 1, %s33
      %s43 = scalar_select %p40, %s42, %s33
      %p44 = scmp.ge.s32.totalorder %s43, 2
      %s45 = scalar_select %p44, 0, %s43
      %s46 = ssub.s32 %s33, %s45
      %s47 = ssub.s32 %s34, %s41
      %s48 = sor.u32 %s46, %s47
      %p49 = scmp.eq.s32.totalorder %s48, 0
      %s51 = sadd.s32 %s50, 1
      %s52 = scalar_select %p49, %s50, %s51
      %p55 = pneg %p49
      %p56 = scmp.eq.s32.totalorder %s26, 1
      %p57 = por %p55, %p56
      %p58 = scmp.ne.s32.totalorder %s50, %s53
      %p59 = scmp.eq.s32.totalorder %s26, 0
      %p60 = por %p58, %p59
      %p61 = scmp.ne.s32.totalorder %s50, %s53
      %p62 = scmp.eq.s32.totalorder %s31, 1
      %p63 = por %p61, %p62
      %p64 = scmp.ne.s32.totalorder %s53, %s54
      %p65 = scmp.eq.s32.totalorder %s31, 0
      %p66 = por %p64, %p65
      %p67 = scmp.ne.s32.totalorder %s53, %s54
      %p68 = scmp.eq.s32.totalorder %s32, 1
      %p69 = por %p67, %p68
      %p71 = scmp.ne.s32.totalorder %s54, %s70
      %p72 = scmp.eq.s32.totalorder %s32, 0
      %p73 = por %p71, %p72
      %s75 = sadd.s32 %s74, 1
      %p78 = scmp.eq.s32.totalorder %s26, 1
      %p79 = scmp.ne.s32.totalorder %s74, %s76
      %p80 = scmp.eq.s32.totalorder %s26, 0
      %p81 = por %p79, %p80
      %p82 = scmp.ne.s32.totalorder %s74, %s76
      %p83 = scmp.eq.s32.totalorder %s31, 1
      %p84 = por %p82, %p83
      %p85 = scmp.ne.s32.totalorder %s76, %s77
      %p86 = scmp.eq.s32.totalorder %s31, 0
      %p87 = por %p85, %p86
      %p88 = scmp.ne.s32.totalorder %s76, %s77
      %p89 = scmp.eq.s32.totalorder %s32, 1
      %p90 = por %p88, %p89
      %p92 = scmp.ne.s32.totalorder %s77, %s91
      %p93 = scmp.eq.s32.totalorder %s32, 0
      %p94 = por %p92, %p93
      %s96 = sadd.s32 %s95, 1
      %p99 = scmp.eq.s32.totalorder %s26, 1
      %p100 = scmp.ne.s32.totalorder %s95, %s97
      %p101 = scmp.eq.s32.totalorder %s26, 0
      %p102 = por %p100, %p101
      %p103 = scmp.ne.s32.totalorder %s95, %s97
      %p104 = scmp.eq.s32.totalorder %s31, 1
      %p105 = por %p103, %p104
      %p106 = scmp.ne.s32.totalorder %s97, %s98
      %p107 = scmp.eq.s32.totalorder %s31, 0
      %p108 = por %p106, %p107
      %p109 = scmp.ne.s32.totalorder %s97, %s98
      %p110 = scmp.eq.s32.totalorder %s32, 1
      %p111 = por %p109, %p110
      %p113 = scmp.ne.s32.totalorder %s98, %s112
      %p114 = scmp.eq.s32.totalorder %s32, 0
      %p115 = por %p113, %p114
      %s117 = sadd.s32 %s116, 1
      %p120 = scmp.eq.s32.totalorder %s26, 1
      %p121 = scmp.ne.s32.totalorder %s116, %s118
      %p122 = scmp.eq.s32.totalorder %s26, 0
      %p123 = por %p121, %p122
      %p124 = scmp.ne.s32.totalorder %s116, %s118
      %p125 = scmp.eq.s32.totalorder %s31, 1
      %p126 = por %p124, %p125
      %p127 = scmp.ne.s32.totalorder %s118, %s119
      %p128 = scmp.eq.s32.totalorder %s31, 0
      %p129 = por %p127, %p128
      %p130 = scmp.ne.s32.totalorder %s118, %s119
      %p131 = scmp.eq.s32.totalorder %s32, 1
      %p132 = por %p130, %p131
      %p134 = scmp.ne.s32.totalorder %s119, %s133
      %p135 = scmp.eq.s32.totalorder %s32, 0
      %p136 = por %p134, %p135
      %s138 = sadd.s32 %s137, 1
      %p141 = scmp.eq.s32.totalorder %s26, 1
      %p142 = scmp.ne.s32.totalorder %s137, %s139
      %p143 = scmp.eq.s32.totalorder %s26, 0
      %p144 = por %p142, %p143
      %p145 = scmp.ne.s32.totalorder %s137, %s139
      %p146 = scmp.eq.s32.totalorder %s31, 1
      %p147 = por %p145, %p146
      %p148 = scmp.ne.s32.totalorder %s139, %s140
      %p149 = scmp.eq.s32.totalorder %s31, 0
      %p150 = por %p148, %p149
      %p151 = scmp.ne.s32.totalorder %s139, %s140
      %p152 = scmp.eq.s32.totalorder %s32, 1
      %p153 = por %p151, %p152
      %p155 = scmp.ne.s32.totalorder %s140, %s154
      %p156 = scmp.eq.s32.totalorder %s32, 0
      %p157 = por %p155, %p156
      %s159 = sadd.s32 %s158, 1
      %p162 = scmp.eq.s32.totalorder %s26, 1
      %p163 = scmp.ne.s32.totalorder %s158, %s160
      %p164 = scmp.eq.s32.totalorder %s26, 0
      %p165 = por %p163, %p164
      %p166 = scmp.ne.s32.totalorder %s158, %s160
      %p167 = scmp.eq.s32.totalorder %s31, 1
      %p168 = por %p166, %p167
      %p169 = scmp.ne.s32.totalorder %s160, %s161
      %p170 = scmp.eq.s32.totalorder %s31, 0
      %p171 = por %p169, %p170
      %p172 = scmp.ne.s32.totalorder %s160, %s161
      %p173 = scmp.eq.s32.totalorder %s32, 1
      %p174 = por %p172, %p173
      %p176 = scmp.ne.s32.totalorder %s161, %s175
      %p177 = scmp.eq.s32.totalorder %s32, 0
      %p178 = por %p176, %p177
      %s180 = sadd.s32 %s179, 1
      %p183 = scmp.eq.s32.totalorder %s26, 1
      %p184 = scmp.ne.s32.totalorder %s179, %s181
      %p185 = scmp.eq.s32.totalorder %s26, 0
      %p186 = por %p184, %p185
      %p187 = scmp.ne.s32.totalorder %s179, %s181
      %p188 = scmp.eq.s32.totalorder %s31, 1
      %p189 = por %p187, %p188
      %p190 = scmp.ne.s32.totalorder %s181, %s182
      %p191 = scmp.eq.s32.totalorder %s31, 0
      %p192 = por %p190, %p191
      %p193 = scmp.ne.s32.totalorder %s181, %s182
      %p194 = scmp.eq.s32.totalorder %s32, 1
      %p195 = por %p193, %p194
      %p197 = scmp.ne.s32.totalorder %s182, %s196
      %p198 = scmp.eq.s32.totalorder %s32, 0
      %p199 = por %p197, %p198
      %s200 = ssub.s32 %s33, %s45
      %s201 = ssub.s32 %s34, %s41
      %s202 = sor.u32 %s200, %s201
      %p203 = scmp.eq.s32.totalorder %s202, 0
      %s205 = sadd.s32 %s204, 1
      %s206 = scalar_select %p203, %s204, %s205
      %p209 = pneg %p203
      %p210 = scmp.eq.s32.totalorder %s26, 1
      %p211 = por %p209, %p210
      %p212 = scmp.ne.s32.totalorder %s204, %s207
      %p213 = scmp.eq.s32.totalorder %s26, 0
      %p214 = por %p212, %p213
      %p215 = scmp.ne.s32.totalorder %s204, %s207
      %p216 = scmp.eq.s32.totalorder %s31, 1
      %p217 = por %p215, %p216
      %p218 = scmp.ne.s32.totalorder %s207, %s208
      %p219 = scmp.eq.s32.totalorder %s31, 0
      %p220 = por %p218, %p219
      %p221 = scmp.ne.s32.totalorder %s207, %s208
      %p222 = scmp.eq.s32.totalorder %s32, 1
      %p223 = por %p221, %p222
      %p225 = scmp.ne.s32.totalorder %s208, %s224
      %p226 = scmp.eq.s32.totalorder %s32, 0
      %p227 = por %p225, %p226
      %s228 = ssub.s32 %s33, %s45
      %s229 = ssub.s32 %s34, %s41
      %s230 = sor.u32 %s228, %s229
      %p231 = scmp.eq.s32.totalorder %s230, 0
      %s233 = sadd.s32 %s232, 1
      %s234 = scalar_select %p231, %s232, %s233
      %p237 = pneg %p231
      %p238 = scmp.eq.s32.totalorder %s26, 1
      %p239 = por %p237, %p238
      %p240 = scmp.ne.s32.totalorder %s232, %s235
      %p241 = scmp.eq.s32.totalorder %s26, 0
      %p242 = por %p240, %p241
      %p243 = scmp.ne.s32.totalorder %s232, %s235
      %p244 = scmp.eq.s32.totalorder %s31, 1
      %p245 = por %p243, %p244
      %p246 = scmp.ne.s32.totalorder %s235, %s236
      %p247 = scmp.eq.s32.totalorder %s31, 0
      %p248 = por %p246, %p247
      %p249 = scmp.ne.s32.totalorder %s235, %s236
      %p250 = scmp.eq.s32.totalorder %s32, 1
      %p251 = por %p249, %p250
      %p253 = scmp.ne.s32.totalorder %s236, %s252
      %p254 = scmp.eq.s32.totalorder %s32, 0
      %p255 = por %p253, %p254
      %s256 = ssub.s32 %s33, %s45
      %s257 = ssub.s32 %s34, %s41
      %s258 = sor.u32 %s256, %s257
      %p259 = scmp.eq.s32.totalorder %s258, 0
      %s261 = sadd.s32 %s260, 1
      %s262 = scalar_select %p259, %s260, %s261
      %p265 = pneg %p259
      %p266 = scmp.eq.s32.totalorder %s26, 1
      %p267 = por %p265, %p266
      %p268 = scmp.ne.s32.totalorder %s260, %s263
      %p269 = scmp.eq.s32.totalorder %s26, 0
      %p270 = por %p268, %p269
      %p271 = scmp.ne.s32.totalorder %s260, %s263
      %p272 = scmp.eq.s32.totalorder %s31, 1
      %p273 = por %p271, %p272
      %p274 = scmp.ne.s32.totalorder %s263, %s264
      %p275 = scmp.eq.s32.totalorder %s31, 0
      %p276 = por %p274, %p275
      %p277 = scmp.ne.s32.totalorder %s263, %s264
      %p278 = scmp.eq.s32.totalorder %s32, 1
      %p279 = por %p277, %p278
      %p281 = scmp.ne.s32.totalorder %s264, %s280
      %p282 = scmp.eq.s32.totalorder %s32, 0
      %p283 = por %p281, %p282
      %p284 = scmp.le.s32.totalorder 1, %s26
      %p285 = scmp.lt.s32.totalorder %s26, 3
      %p286 = pnand %p284, %p285
      %p287 = pneg %p286
      // Predicated region
      $region9: #{tpu_custom_call.1} parent=5 // pred_check
        _
      $region10: #{tpu_custom_call.1} parent=5 // pred_check_branch
        %289 = sbr.rel (%p286) target = $region12
      $region11: #{tpu_custom_call.1} parent=5 // pred_region
        %s290 = ssub.s32 %s26, 1
        // Predicated region
        $region13: #{tpu_custom_call.1} parent=11 // pred_check
          %p291 = pneg %p87
        $region14: #{tpu_custom_call.1} parent=11 // pred_check_branch
          %293 = sbr.rel (%p291) target = $region16
        $region15: #{tpu_custom_call.1} parent=11 // pred_region
          %s295 = ssub.s32 256, 256
          %296 = vsyncadd [#allocation6], %s295
          %s297 = sshll.u32 [#allocation5], 4
          %s298 = int_to_ptr.vmem [resolvable:$true] %s297
          %303 = dma.hbm_to_vmem [thread:$0]  %s1, 256, %s298, [#allocation6], 64, 64, 4
        $region16: #{tpu_custom_call.1} parent=11 // pred_fallthru
          _
        // Predicated region
        $region17: #{tpu_custom_call.1} parent=11 // pred_check
          %p304 = pneg %p108
        $region18: #{tpu_custom_call.1} parent=11 // pred_check_branch
          %306 = sbr.rel (%p304) target = $region20
        $region19: #{tpu_custom_call.1} parent=11 // pred_region
          _
        $region20: #{tpu_custom_call.1} parent=11 // pred_fallthru
          _
        // Predicated region
        $region21: #{tpu_custom_call.1} parent=11 // pred_check
          %p307 = pneg %p129
        $region22: #{tpu_custom_call.1} parent=11 // pred_check_branch
          %309 = sbr.rel (%p307) target = $region24
        $region23: #{tpu_custom_call.1} parent=11 // pred_region
          %s311 = ssub.s32 256, 256
          %312 = vsyncadd [#allocation6], %s311
          %s313 = sshll.u32 [#allocation7], 4
          %s314 = int_to_ptr.vmem [resolvable:$true] %s313
          %319 = dma.hbm_to_vmem [thread:$0]  %s3, 256, %s314, [#allocation6], 64, 64, 4
        $region24: #{tpu_custom_call.1} parent=11 // pred_fallthru
          _
        // Predicated region
        $region25: #{tpu_custom_call.1} parent=11 // pred_check
          %p320 = pneg %p150
        $region26: #{tpu_custom_call.1} parent=11 // pred_check_branch
          %322 = sbr.rel (%p320) target = $region28
        $region27: #{tpu_custom_call.1} parent=11 // pred_region
          _
        $region28: #{tpu_custom_call.1} parent=11 // pred_fallthru
          _
        // Predicated region
        $region29: #{tpu_custom_call.1} parent=11 // pred_check
          %p323 = pneg %p171
        $region30: #{tpu_custom_call.1} parent=11 // pred_check_branch
          %325 = sbr.rel (%p323) target = $region32
        $region31: #{tpu_custom_call.1} parent=11 // pred_region
          _
        $region32: #{tpu_custom_call.1} parent=11 // pred_fallthru
          _
        // Predicated region
        $region33: #{tpu_custom_call.1} parent=11 // pred_check
          %p326 = pneg %p192
        $region34: #{tpu_custom_call.1} parent=11 // pred_check_branch
          %328 = sbr.rel (%p326) target = $region36
        $region35: #{tpu_custom_call.1} parent=11 // pred_region
          _
        $region36: #{tpu_custom_call.1} parent=11 // pred_fallthru
          _
      $region12: #{tpu_custom_call.1} parent=5 // pred_fallthru
        _
      %p329 = scmp.lt.s32.totalorder %s26, 2
      // Predicated region
      $region37: #{tpu_custom_call.1} parent=5 // pred_check
        %p330 = pneg %p329
      $region38: #{tpu_custom_call.1} parent=5 // pred_check_branch
        %332 = sbr.rel (%p330) target = $region40
      $region39: #{tpu_custom_call.1} parent=5 // pred_region
        // Predicated region
        $region41: #{tpu_custom_call.1} parent=39 // pred_check
          %p333 = pneg %p60
        $region42: #{tpu_custom_call.1} parent=39 // pred_check_branch
          %335 = sbr.rel (%p333) target = $region44
        $region43: #{tpu_custom_call.1} parent=39 // pred_region
          %s336 = sand.u32 %s50, 1
          %s337 = scalar_lea.sflag [#allocation3], %s336
          %s338 = sand.u32 %s50, 1
          %s339 = smul.addr %s338, 8
          %s340 = scalar_lea.vmem [#allocation2], %s339
          %s342 = ssub.s32 128, 128
          %343 = vsyncadd %s337, %s342
          %s344 = sadd.s32 %s34, %s33
          %s345 = smul.addr %s344, 128
          %s346 = scalar_lea.hbm %s0, %s345
          %s348 = sshll.u32 %s340, 4
          %s349 = int_to_ptr.vmem [resolvable:$true] %s348
          %351 = dma.hbm_to_vmem [thread:$0]  %s346, 128, %s349, %s337
        $region44: #{tpu_custom_call.1} parent=39 // pred_fallthru
          _
      $region40: #{tpu_custom_call.1} parent=5 // pred_fallthru
        _
      %p352 = scmp.le.s32.totalorder 1, %s26
      %p353 = scmp.lt.s32.totalorder %s26, 3
      %p354 = pnand %p352, %p353
      %p355 = pneg %p354
      // Predicated region
      $region45: #{tpu_custom_call.1} parent=5 // pred_check
        _
      $region46: #{tpu_custom_call.1} parent=5 // pred_check_branch
        %357 = sbr.rel (%p354) target = $region48
      $region47: #{tpu_custom_call.1} parent=5 // pred_region
        %s358 = ssub.s32 %s26, 1
        %s359 = sand.u32 %s53, 1
        %s360 = scalar_lea.sflag [#allocation3], %s359
        %s361 = sand.u32 %s53, 1
        %s362 = smul.addr %s361, 8
        %s363 = scalar_lea.vmem [#allocation2], %s362
        // Predicated region
        $region49: #{tpu_custom_call.1} parent=47 // pred_check
          %p364 = pneg %p66
        $region50: #{tpu_custom_call.1} parent=47 // pred_check_branch
          %366 = sbr.rel (%p364) target = $region52
        $region51: #{tpu_custom_call.1} parent=47 // pred_region
          %367 = dma.done %s360, 128
        $region52: #{tpu_custom_call.1} parent=47 // pred_fallthru
          _
        // Predicated region
        $region53: #{tpu_custom_call.1} parent=47 // pred_check
          %p368 = pneg %p87
        $region54: #{tpu_custom_call.1} parent=47 // pred_check_branch
          %370 = sbr.rel (%p368) target = $region56
        $region55: #{tpu_custom_call.1} parent=47 // pred_region
          %371 = dma.done [#allocation6], 256
        $region56: #{tpu_custom_call.1} parent=47 // pred_fallthru
          _
        // Predicated region
        $region57: #{tpu_custom_call.1} parent=47 // pred_check
          %p372 = pneg %p129
        $region58: #{tpu_custom_call.1} parent=47 // pred_check_branch
          %374 = sbr.rel (%p372) target = $region60
        $region59: #{tpu_custom_call.1} parent=47 // pred_region
          %375 = dma.done [#allocation6], 256
        $region60: #{tpu_custom_call.1} parent=47 // pred_fallthru
          _
        %s376 = sand.u32 %s53, 1
        %s377 = scalar_lea.sflag [#allocation3], %s376
        %s378 = sand.u32 %s53, 1
        %s379 = smul.addr %s378, 8
        %s380 = scalar_lea.vmem [#allocation2], %s379
        %p381 = pneg %p66
        %p382 = pneg %p63
        %p383 = pneg %p87
        %p384 = pneg %p84
        %p385 = pneg %p108
        %p386 = pneg %p105
        %p387 = pneg %p129
        %p388 = pneg %p126
        %p389 = pneg %p150
        %p390 = pneg %p147
        %p391 = pneg %p171
        %p392 = pneg %p168
        %p393 = pneg %p192
        %p394 = pneg %p189
        %p395 = pneg %p220
        %p396 = pneg %p217
        %s397 = sand.u32 %s207, 1
        %s398 = scalar_lea.sflag [#allocation4], %s397
        %s399 = sand.u32 %s207, 1
        %s400 = smul.addr %s399, 4
        %s401 = scalar_lea.vmem [#allocation8], %s400
        %p402 = pneg %p248
        %p403 = pneg %p245
        %s404 = sand.u32 %s31, 1
        %s405 = scalar_lea.sflag [#allocation10], %s404
        %s406 = sand.u32 %s235, 1
        %s407 = smul.addr %s406, 4
        %s408 = scalar_lea.vmem [#allocation9], %s407
        %p409 = pneg %p276
        %p410 = pneg %p273
        %s411 = sand.u32 %s31, 1
        %s412 = scalar_lea.sflag [#allocation10], %s411
        %s413 = sand.u32 %s263, 1
        %s414 = smul.addr %s413, 4
        %s415 = scalar_lea.vmem [#allocation11], %s414
        %v417 = vld [vmem:[%s363] sm:$0xff]
        %v418 = vpack.c.bf16 %v417, %v417
        %v419 = vld [vmem:[#allocation5] sm:$0xf]
        %v420 = vld [vmem:[#allocation5 + $0x4] sm:$0xf]
        %v421 = vld [vmem:[#allocation5 + $0x8] sm:$0xf]
        %v422 = vld [vmem:[#allocation5 + $0xc] sm:$0xf]
        %v423 = vld [vmem:[%s2] sm:$0x1]
        %v425 = vlaneseq
        %v426 = vshrl.u32 %v425, 7
        %v427 = vsub.s32 0, %v426
        %v428 = vrot.slane %v423, %v427
        %v434 = vunpack.c.l.b16 %v419
        %v435 = vunpack.c.l.b16 %v420
        %v436 = vunpack.c.l.b16 %v421
        %v437 = vunpack.c.l.b16 %v422
        %v438 = vpack.c.b16 %v435, %v434
        %v439 = vpack.c.b16 %v437, %v436
        %vm442 = vcmask 261120
        %v444 = vsel %vm442, %v418, 0
        %446 = vmatprep.subr.bf16.mxu0 0
        %447 = vmatpush1.bf16.msra.mxu0 %v438
        %448 = vmatprep.subr.bf16.mxu0 0
        %449 = vmatpush1.bf16.msra.mxu0 %v439
        %450 = vmatprep.subr.bf16.mxu0 0
        %451 = vmatpush1.bf16.msra.mxu0 0
        %452 = vmatprep.subr.bf16.mxu0 0
        %453 = vmatpush1.bf16.msra.mxu0 0
        %454 = vmatprep.subr.bf16.mxu0 0
        %455 = vmatpush1.bf16.msra.mxu0 0
        %456 = vmatprep.subr.bf16.mxu0 0
        %457 = vmatpush1.bf16.msra.mxu0 0
        %458 = vmatprep.subr.bf16.mxu0 0
        %459 = vmatpush1.bf16.msra.mxu0 0
        %460 = vmatprep.subr.bf16.mxu0 0
        %461 = vmatpush1.bf16.msra.mxu0 0
        %462 = vmatprep.subr.bf16.mxu0 0
        %463 = vmatpush1.bf16.msra.mxu0 0
        %464 = vmatprep.subr.bf16.mxu0 0
        %465 = vmatpush1.bf16.msra.mxu0 0
        %466 = vmatprep.subr.bf16.mxu0 0
        %467 = vmatpush1.bf16.msra.mxu0 0
        %468 = vmatprep.subr.bf16.mxu0 0
        %469 = vmatpush1.bf16.msra.mxu0 0
        %470 = vmatprep.subr.bf16.mxu0 0
        %471 = vmatpush1.bf16.msra.mxu0 0
        %472 = vmatprep.subr.bf16.mxu0 0
        %473 = vmatpush1.bf16.msra.mxu0 0
        %474 = vmatprep.subr.bf16.mxu0 0
        %475 = vmatpush1.bf16.msra.mxu0 0
        %476 = vmatprep.subr.bf16.mxu0 0
        %477 = vmatpush1.bf16.msra.mxu0 0
        %478 = vmatprep.mubr.bf16.mxu0 0
        %479 = vmatmul.mubr.bf16.gmra.mrb[0].mxu0 %v444
        %v480 = vpop.f32.mrb[0].mxu0
        %v481 = vadd.f32 %v428, %v480
        %v482 = vpop.f32.mrb[0].mxu0
        %v483 = vpop.f32.mrb[0].mxu0
        %v484 = vpop.f32.mrb[0].mxu0
        %485 = vdwg.mxu0
        %v486 = vld [vmem:[#allocation7] sm:$0xf]
        %v487 = vld [vmem:[#allocation7 + $0x4] sm:$0xf]
        %v488 = vld [vmem:[#allocation7 + $0x8] sm:$0xf]
        %v489 = vld [vmem:[#allocation7 + $0xc] sm:$0xf]
        %v490 = vld [vmem:[%s4] sm:$0x1]
        %v492 = vlaneseq
        %v493 = vshrl.u32 %v492, 7
        %v494 = vsub.s32 0, %v493
        %v495 = vrot.slane %v490, %v494
        %v501 = vunpack.c.l.b16 %v486
        %v502 = vunpack.c.l.b16 %v487
        %v503 = vunpack.c.l.b16 %v488
        %v504 = vunpack.c.l.b16 %v489
        %v505 = vpack.c.b16 %v502, %v501
        %v506 = vpack.c.b16 %v504, %v503
        %509 = vmatprep.subr.bf16.mxu0 0
        %510 = vmatpush1.bf16.msra.mxu0 %v505
        %511 = vmatprep.subr.bf16.mxu0 0
        %512 = vmatpush1.bf16.msra.mxu0 %v506
        %513 = vmatprep.subr.bf16.mxu0 0
        %514 = vmatpush1.bf16.msra.mxu0 0
        %515 = vmatprep.subr.bf16.mxu0 0
        %516 = vmatpush1.bf16.msra.mxu0 0
        %517 = vmatprep.subr.bf16.mxu0 0
        %518 = vmatpush1.bf16.msra.mxu0 0
        %519 = vmatprep.subr.bf16.mxu0 0
        %520 = vmatpush1.bf16.msra.mxu0 0
        %521 = vmatprep.subr.bf16.mxu0 0
        %522 = vmatpush1.bf16.msra.mxu0 0
        %523 = vmatprep.subr.bf16.mxu0 0
        %524 = vmatpush1.bf16.msra.mxu0 0
        %525 = vmatprep.subr.bf16.mxu0 0
        %526 = vmatpush1.bf16.msra.mxu0 0
        %527 = vmatprep.subr.bf16.mxu0 0
        %528 = vmatpush1.bf16.msra.mxu0 0
        %529 = vmatprep.subr.bf16.mxu0 0
        %530 = vmatpush1.bf16.msra.mxu0 0
        %531 = vmatprep.subr.bf16.mxu0 0
        %532 = vmatpush1.bf16.msra.mxu0 0
        %533 = vmatprep.subr.bf16.mxu0 0
        %534 = vmatpush1.bf16.msra.mxu0 0
        %535 = vmatprep.subr.bf16.mxu0 0
        %536 = vmatpush1.bf16.msra.mxu0 0
        %537 = vmatprep.subr.bf16.mxu0 0
        %538 = vmatpush1.bf16.msra.mxu0 0
        %539 = vmatprep.subr.bf16.mxu0 0
        %540 = vmatpush1.bf16.msra.mxu0 0
        %541 = vmatprep.mubr.bf16.mxu0 0
        %542 = vmatmul.mubr.bf16.gmra.mrb[0].mxu0 %v444
        %v543 = vpop.f32.mrb[0].mxu0
        %v544 = vadd.f32 %v495, %v543
        %v545 = vpop.f32.mrb[0].mxu0
        %v546 = vpop.f32.mrb[0].mxu0
        %v547 = vpop.f32.mrb[0].mxu0
        %548 = vdwg.mxu0
        %v549 = vld [vmem:[%s5] sm:$0xf]
        %v550 = vld [vmem:[%s5 + $0x4] sm:$0xf]
        %v551 = vld [vmem:[%s5 + $0x8] sm:$0xf]
        %v552 = vld [vmem:[%s5 + $0xc] sm:$0xf]
        %v553 = vld [vmem:[%s6] sm:$0x1]
        %v555 = vlaneseq
        %v556 = vshrl.u32 %v555, 7
        %v557 = vsub.s32 0, %v556
        %v558 = vrot.slane %v553, %v557
        %v564 = vunpack.c.l.b16 %v549
        %v565 = vunpack.c.l.b16 %v550
        %v566 = vunpack.c.l.b16 %v551
        %v567 = vunpack.c.l.b16 %v552
        %v568 = vpack.c.b16 %v565, %v564
        %v569 = vpack.c.b16 %v567, %v566
        %572 = vmatprep.subr.bf16.mxu0 0
        %573 = vmatpush1.bf16.msra.mxu0 %v568
        %574 = vmatprep.subr.bf16.mxu0 0
        %575 = vmatpush1.bf16.msra.mxu0 %v569
        %576 = vmatprep.subr.bf16.mxu0 0
        %577 = vmatpush1.bf16.msra.mxu0 0
        %578 = vmatprep.subr.bf16.mxu0 0
        %579 = vmatpush1.bf16.msra.mxu0 0
        %580 = vmatprep.subr.bf16.mxu0 0
        %581 = vmatpush1.bf16.msra.mxu0 0
        %582 = vmatprep.subr.bf16.mxu0 0
        %583 = vmatpush1.bf16.msra.mxu0 0
        %584 = vmatprep.subr.bf16.mxu0 0
        %585 = vmatpush1.bf16.msra.mxu0 0
        %586 = vmatprep.subr.bf16.mxu0 0
        %587 = vmatpush1.bf16.msra.mxu0 0
        %588 = vmatprep.subr.bf16.mxu0 0
        %589 = vmatpush1.bf16.msra.mxu0 0
        %590 = vmatprep.subr.bf16.mxu0 0
        %591 = vmatpush1.bf16.msra.mxu0 0
        %592 = vmatprep.subr.bf16.mxu0 0
        %593 = vmatpush1.bf16.msra.mxu0 0
        %594 = vmatprep.subr.bf16.mxu0 0
        %595 = vmatpush1.bf16.msra.mxu0 0
        %596 = vmatprep.subr.bf16.mxu0 0
        %597 = vmatpush1.bf16.msra.mxu0 0
        %598 = vmatprep.subr.bf16.mxu0 0
        %599 = vmatpush1.bf16.msra.mxu0 0
        %600 = vmatprep.subr.bf16.mxu0 0
        %601 = vmatpush1.bf16.msra.mxu0 0
        %602 = vmatprep.subr.bf16.mxu0 0
        %603 = vmatpush1.bf16.msra.mxu0 0
        %604 = vmatprep.mubr.bf16.mxu0 0
        %605 = vmatmul.mubr.bf16.gmra.mrb[0].mxu0 %v444
        %v606 = vpop.f32.mrb[0].mxu0
        %v607 = vadd.f32 %v558, %v606
        %v608 = vpop.f32.mrb[0].mxu0
        %v609 = vpop.f32.mrb[0].mxu0
        %v610 = vpop.f32.mrb[0].mxu0
        %611 = vdwg.mxu0
        %v612 = vpack.c.bf16 %v481, %v481
        %vm613 = vcmask 257024
        %614 = vst.msk [vmem:[%s401] sm:$0xf] %vm613, %v612
        %v615 = vpack.c.bf16 %v544, %v544
        %616 = vst.msk [vmem:[%s408] sm:$0xf] %vm613, %v615
        %v617 = vpack.c.bf16 %v607, %v607
        %618 = vst.msk [vmem:[%s415] sm:$0xf] %vm613, %v617
        %s619 = sand.u32 %s207, 1
        %s620 = scalar_lea.sflag [#allocation4], %s619
        %s621 = sand.u32 %s207, 1
        %s622 = smul.addr %s621, 4
        %s623 = scalar_lea.vmem [#allocation8], %s622
        %s624 = sand.u32 %s31, 1
        %s625 = scalar_lea.sflag [#allocation10], %s624
        %s626 = sand.u32 %s235, 1
        %s627 = smul.addr %s626, 4
        %s628 = scalar_lea.vmem [#allocation9], %s627
        %s629 = sand.u32 %s31, 1
        %s630 = scalar_lea.sflag [#allocation10], %s629
        %s631 = sand.u32 %s263, 1
        %s632 = smul.addr %s631, 4
        %s633 = scalar_lea.vmem [#allocation11], %s632
        // Predicated region
        $region61: #{tpu_custom_call.1} parent=47 // pred_check
          %p634 = pneg %p217
        $region62: #{tpu_custom_call.1} parent=47 // pred_check_branch
          %636 = sbr.rel (%p634) target = $region64
        $region63: #{tpu_custom_call.1} parent=47 // pred_region
          %s638 = ssub.s32 64, 64
          %639 = vsyncadd %s620, %s638
          %s640 = sadd.s32 %s36, %s35
          %s641 = smul.addr %s640, 64
          %s642 = scalar_lea.hbm %s7, %s641
          %s644 = sshll.u32 %s623, 4
          %s645 = int_to_ptr.vmem [resolvable:$true] %s644
          %647 = dma.vmem_to_hbm [thread:$0]  %s645, 64, %s642, %s620
        $region64: #{tpu_custom_call.1} parent=47 // pred_fallthru
          _
        // Predicated region
        $region65: #{tpu_custom_call.1} parent=47 // pred_check
          %p648 = pneg %p245
        $region66: #{tpu_custom_call.1} parent=47 // pred_check_branch
          %650 = sbr.rel (%p648) target = $region68
        $region67: #{tpu_custom_call.1} parent=47 // pred_region
          %s652 = ssub.s32 64, 64
          %653 = vsyncadd %s625, %s652
          %s654 = sadd.s32 %s36, %s35
          %s655 = smul.addr %s654, 64
          %s656 = scalar_lea.hbm %s8, %s655
          %s658 = sshll.u32 %s628, 4
          %s659 = int_to_ptr.vmem [resolvable:$true] %s658
          %661 = dma.vmem_to_hbm [thread:$0]  %s659, 64, %s656, %s625
        $region68: #{tpu_custom_call.1} parent=47 // pred_fallthru
          _
        // Predicated region
        $region69: #{tpu_custom_call.1} parent=47 // pred_check
          %p662 = pneg %p273
        $region70: #{tpu_custom_call.1} parent=47 // pred_check_branch
          %664 = sbr.rel (%p662) target = $region72
        $region71: #{tpu_custom_call.1} parent=47 // pred_region
          %s666 = ssub.s32 64, 64
          %667 = vsyncadd %s630, %s666
          %s668 = sadd.s32 %s36, %s35
          %s669 = smul.addr %s668, 64
          %s670 = scalar_lea.hbm %s9, %s669
          %s672 = sshll.u32 %s633, 4
          %s673 = int_to_ptr.vmem [resolvable:$true] %s672
          %675 = dma.vmem_to_hbm [thread:$0]  %s673, 64, %s670, %s630
        $region72: #{tpu_custom_call.1} parent=47 // pred_fallthru
          _
      $region48: #{tpu_custom_call.1} parent=5 // pred_fallthru
        _
      %p676 = scmp.le.s32.totalorder 2, %s26
      // Predicated region
      $region73: #{tpu_custom_call.1} parent=5 // pred_check
        %p677 = pneg %p676
      $region74: #{tpu_custom_call.1} parent=5 // pred_check_branch
        %679 = sbr.rel (%p677) target = $region76
      $region75: #{tpu_custom_call.1} parent=5 // pred_region
        %s680 = ssub.s32 %s26, 2
        // Predicated region
        $region77: #{tpu_custom_call.1} parent=75 // pred_check
          %p681 = pneg %p223
        $region78: #{tpu_custom_call.1} parent=75 // pred_check_branch
          %683 = sbr.rel (%p681) target = $region80
        $region79: #{tpu_custom_call.1} parent=75 // pred_region
          %s684 = sand.u32 %s208, 1
          %s685 = scalar_lea.sflag [#allocation4], %s684
          %s686 = sand.u32 %s208, 1
          %s687 = smul.addr %s686, 4
          %s688 = scalar_lea.vmem [#allocation8], %s687
          %689 = dma.done %s685, 64
        $region80: #{tpu_custom_call.1} parent=75 // pred_fallthru
          _
        // Predicated region
        $region81: #{tpu_custom_call.1} parent=75 // pred_check
          %p690 = pneg %p251
        $region82: #{tpu_custom_call.1} parent=75 // pred_check_branch
          %692 = sbr.rel (%p690) target = $region84
        $region83: #{tpu_custom_call.1} parent=75 // pred_region
          %s693 = sand.u32 %s32, 1
          %s694 = scalar_lea.sflag [#allocation10], %s693
          %s695 = sand.u32 %s236, 1
          %s696 = smul.addr %s695, 4
          %s697 = scalar_lea.vmem [#allocation9], %s696
          %698 = dma.done %s694, 64
        $region84: #{tpu_custom_call.1} parent=75 // pred_fallthru
          _
        // Predicated region
        $region85: #{tpu_custom_call.1} parent=75 // pred_check
          %p699 = pneg %p279
        $region86: #{tpu_custom_call.1} parent=75 // pred_check_branch
          %701 = sbr.rel (%p699) target = $region88
        $region87: #{tpu_custom_call.1} parent=75 // pred_region
          %s702 = sand.u32 %s32, 1
          %s703 = scalar_lea.sflag [#allocation10], %s702
          %s704 = sand.u32 %s264, 1
          %s705 = smul.addr %s704, 4
          %s706 = scalar_lea.vmem [#allocation11], %s705
          %707 = dma.done %s703, 64
        $region88: #{tpu_custom_call.1} parent=75 // pred_fallthru
          _
      $region76: #{tpu_custom_call.1} parent=5 // pred_fallthru
        _
    $region6: #{tpu_custom_call.1} parent=1 // loop_footer
      %s30 = sadd.s32 1, %s26
    $region7: #{tpu_custom_call.1} parent=1 // loop_footer_branch
      %25 = sbr.rel target = $region3
    $region8: #{tpu_custom_call.1} parent=1 // loop_exit
      _
    %708 = vsyncpa [#allocation3], 1
    %s709 = scalar_lea.sflag [#allocation3], 1
    %710 = vsyncpa %s709, 1
    %711 = vsyncpa [#allocation6], 1
    %712 = vsyncpa [#allocation4], 1
    %s713 = scalar_lea.sflag [#allocation4], 1
    %714 = vsyncpa %s713, 1
    %715 = vsyncpa [#allocation10], 1
    %s716 = scalar_lea.sflag [#allocation10], 1
    %717 = vsyncpa %s716, 1

</llo_original>
